<compile_context>
chip_gen: v5e
topology: v5e:2x2
jax: 0.10.0
libtpu: 0.0.40
codegen_flags: <defaults>
</compile_context>

<pallas_src>
import jax
import jax.numpy as jnp
from jax import lax
from jax.experimental import pallas as pl
from jax.experimental.pallas import tpu as pltpu


_VMEM_BUDGET = 24 << 20     # conservative per-step working-set target (bytes)
_VMEM_LIMIT = 48 << 20      # below v7x's 64 MiB physical, above all scoped defaults


def _round_up(x, m):
    return (x + m - 1) // m * m


def fertility_kernel(x_ref, w_ref, b_ref, out_ref, acc_ref):
    """One (row-tile, K-tile) grid step.

    x_ref:   (tm, tk)            activation tile (streamed in its native dtype)
    w_ref:   (n_fert, tk) bf16   Linear weight K-slice (nn.Linear layout)
    b_ref:   (n_fert, 1) f32     Linear bias, resident
    out_ref: (1, 1, tm) int32    lane-dense argmax indices for this row tile
    acc_ref: (n_fert, tm) f32    logits^T accumulator (VMEM scratch)
    """
    k = pl.program_id(1)

    @pl.when(k == 0)
    def _():
        acc_ref[...] = jnp.zeros_like(acc_ref)

    # bf16 MXU path: cast rides under the DMA (no-op if input is already bf16).
    x = x_ref[...].astype(jnp.bfloat16)              # (tm, tk)
    w = w_ref[...]                                   # (F, tk) bf16
    # logits_T[f, t] += sum_d W[f, d] * x[t, d]  -- NT form, no transposed copy.
    acc_ref[...] += lax.dot_general(
        w, x, dimension_numbers=(((1,), (1,)), ((), ())),
        preferred_element_type=jnp.float32)

    @pl.when(k == pl.num_programs(1) - 1)
    def _():
        r = jnp.maximum(acc_ref[...] + b_ref[...], 0.0)        # ReLU(logits^T), (F, tm)
        # argmax over the fertility axis; log_softmax is a monotone per-token
        # shift so it is dropped.  min-of-index on ties == first occurrence,
        # matching torch.argmax.
        n_fert = r.shape[0]
        fmax = jnp.max(r, axis=0, keepdims=True)               # (1, tm)
        fids = lax.broadcasted_iota(jnp.int32, r.shape, 0)     # (F, tm)
        idx = jnp.min(jnp.where(r == fmax, fids, jnp.int32(n_fert)),
                      axis=0, keepdims=True)                   # (1, tm)
        out_ref[...] = idx[None]                               # (1, 1, tm)


def _pick_k_tile(D):
    if D <= 1024:
        return D
    for tk in (1024, 512, 256, 128):
        if D % tk == 0:
            return tk
    return D          # no aligned divisor -> single K step


def _pick_row_tile(N, tm_request):
    if N < 128:
        return N                                    # single full-extent row block
    tm = min(tm_request, (N // 128) * 128)          # never larger than the array
    if N >= 256:
        # keep >= 2 row blocks so the "parallel" axis can shard across v7x's 2 TCs
        tm = min(tm, max(128, (N // 2 // 128) * 128))
    return max(tm, 128)


def fertility_forward(e_output, weight, bias, *, tm=1024, pipeline_depth=None):
    """Fertility forward.

    e_output: (B, S, d_model)                   activations (f32 or bf16)
    weight:   (max_fertilities, d_model) f32    nn.Linear weight layout
    bias:     (max_fertilities,) f32
    Returns:  (B, S) int32 fertility indices.
    """
    B, S, D = e_output.shape
    n_fert, d_model = weight.shape
    assert d_model == D
    N = B * S
    x_bytes = jnp.dtype(e_output.dtype).itemsize

    tk = _pick_k_tile(D)
    tm = _pick_row_tile(N, tm)

    def est_vmem(tm_, tk_):
        f_pad = _round_up(n_fert, 8)
        return (2 * tm_ * tk_ * x_bytes          # double-buffered activation blocks
                + tm_ * tk_ * 2                  # in-kernel bf16 copy of x
                + 2 * f_pad * tk_ * 2            # double-buffered weight blocks
                + 2 * f_pad * tm_ * 4            # accumulator scratch + dot temporary
                + 8 * tm_ * 4)                   # output block + index temporaries

    while tm > 128 and est_vmem(tm, tk) > _VMEM_BUDGET:
        tm = max(128, ((tm // 2) // 128) * 128)

    grid_m = pl.cdiv(N, tm)
    grid_k = pl.cdiv(D, tk)

    x_flat = e_output.reshape(N, D)                 # free reshape; streamed as-is
    w = weight.astype(jnp.bfloat16)                 # tiny (F, D) cast, done once
    b2d = bias.reshape(n_fert, 1).astype(jnp.float32)

    x_spec_kwargs = {}
    if pipeline_depth is not None:
        # Tunable: pl.Buffered(3) can smooth DMA jitter once the kernel is a pure
        # HBM stream -- sweep on production shapes.
        x_spec_kwargs["pipeline_mode"] = pl.Buffered(pipeline_depth)

    cost = pl.CostEstimate(
        flops=2 * grid_m * tm * D * n_fert,
        bytes_accessed=(N * D * x_bytes + n_fert * D * 2 + n_fert * 4
                        + grid_m * tm * 4),
        transcendentals=0,
    )

    out = pl.pallas_call(
        fertility_kernel,
        out_shape=jax.ShapeDtypeStruct((grid_m, 1, tm), jnp.int32),
        grid_spec=pltpu.PrefetchScalarGridSpec(
            num_scalar_prefetch=0,
            grid=(grid_m, grid_k),
            in_specs=[
                pl.BlockSpec((tm, tk), lambda i, k: (i, k), **x_spec_kwargs),
                pl.BlockSpec((n_fert, tk), lambda i, k: (0, k)),
                pl.BlockSpec((n_fert, 1), lambda i, k: (0, 0)),
            ],
            out_specs=pl.BlockSpec((1, 1, tm), lambda i, k: (i, 0, 0)),
            scratch_shapes=[pltpu.VMEM((n_fert, tm), jnp.float32)],
        ),
        compiler_params=pltpu.CompilerParams(
            dimension_semantics=("parallel", "arbitrary"),
            vmem_limit_bytes=_VMEM_LIMIT,
        ),
        cost_estimate=cost,
    )(x_flat, w, b2d)

    return out.reshape(grid_m * tm)[:N].reshape(B, S)


if __name__ == "__main__":
    # Small deterministic problem: batch=2, seq=8, d_model=32, max_fertilities=50
    B, S, D, N_FERT = 2, 8, 32, 50

    key = jax.random.PRNGKey(0)
    k_x, k_w, k_b = jax.random.split(key, 3)

    e_output = jax.random.normal(k_x, (B, S, D), dtype=jnp.float32)
    # nn.Linear(d_model, max_fertilities): weight (n_fert, d_model), bias (n_fert,)
    weight = jax.random.normal(k_w, (N_FERT, D), dtype=jnp.float32) * (1.0 / jnp.sqrt(D))
    bias = jax.random.normal(k_b, (N_FERT,), dtype=jnp.float32) * 0.1

    fert = jax.block_until_ready(fertility_forward(e_output, weight, bias))

    # Reference: same bf16 rounding and MXU orientation as the kernel, then the
    # full module semantics (linear -> relu -> log_softmax -> argmax).
    x_bf = e_output.reshape(-1, D).astype(jnp.bfloat16)
    w_bf = weight.astype(jnp.bfloat16)
    logits = lax.dot_general(w_bf, x_bf, (((1,), (1,)), ((), ())),
                             preferred_element_type=jnp.float32).T + bias
    ref = jnp.argmax(jax.nn.log_softmax(jax.nn.relu(logits), axis=-1), axis=-1)
    ref = ref.reshape(B, S).astype(jnp.int32)

    assert fert.shape == (B, S) and fert.dtype == jnp.int32
    assert bool(jnp.all(fert == ref)), (fert, ref)

    print("KERNEL_OK")
</pallas_src>

<mosaic_0001>
module attributes {stable_mosaic.version = 11 : i64} {
  func.func @fertility_kernel(%arg0: i32, %arg1: i32, %arg2: memref<16x32xf32, #tpu.memory_space<vmem>>, %arg3: memref<50x32xbf16, #tpu.memory_space<vmem>>, %arg4: memref<50x1xf32, #tpu.memory_space<vmem>>, %arg5: memref<1x1x16xi32, #tpu.memory_space<vmem>>, %arg6: memref<50x16xf32, #tpu.memory_space<vmem>>) attributes {dimension_semantics = [#tpu.dimension_semantics<parallel>, #tpu.dimension_semantics<arbitrary>], iteration_bounds = array<i64: 1, 1>, scalar_prefetch = 0 : i64, scratch_operands = 1 : i64, tpu.core_type = #tpu.core_type<tc>, window_params = [{transform_indices = @transform_0, window_bounds = array<i64: 16, 32>}, {transform_indices = @transform_1, window_bounds = array<i64: 50, 32>}, {pipeline_mode = #tpu.pipeline_mode<synchronous>, transform_indices = @transform_2, window_bounds = array<i64: 50, 1>}, {transform_indices = @transform_3, window_bounds = array<i64: 1, 1, 16>}]} {
    %c0_i32 = arith.constant 0 : i32
    %0 = arith.cmpi eq, %arg1, %c0_i32 : i32
    %1 = arith.extui %0 : i1 to i32
    %c0_i32_0 = arith.constant 0 : i32
    %2 = arith.cmpi ne, %1, %c0_i32_0 : i32
    scf.if %2 {
      %cst_10 = arith.constant 0.000000e+00 : f32
      %13 = vector.broadcast %cst_10 : f32 to vector<50x16xf32>
      %c0_11 = arith.constant 0 : index
      %c0_12 = arith.constant 0 : index
      %14 = vector.load %arg6[%c0_11, %c0_12] : memref<50x16xf32, #tpu.memory_space<vmem>>, vector<50x16xf32>
      tpu.vector_store %arg6[%c0_11, %c0_12], %13 {strides = array<i32>} : memref<50x16xf32, #tpu.memory_space<vmem>>, vector<50x16xf32>,
    } else {
    }
    %c0 = arith.constant 0 : index
    %c0_1 = arith.constant 0 : index
    %3 = vector.load %arg2[%c0, %c0_1] : memref<16x32xf32, #tpu.memory_space<vmem>>, vector<16x32xf32>
    %4 = arith.truncf %3 : vector<16x32xf32> to vector<16x32xbf16>
    %c0_2 = arith.constant 0 : index
    %c0_3 = arith.constant 0 : index
    %5 = vector.load %arg3[%c0_2, %c0_3] : memref<50x32xbf16, #tpu.memory_space<vmem>>, vector<50x32xbf16>
    %c0_4 = arith.constant 0 : index
    %c0_5 = arith.constant 0 : index
    %6 = vector.load %arg6[%c0_4, %c0_5] : memref<50x16xf32, #tpu.memory_space<vmem>>, vector<50x16xf32>
    %cst = arith.constant dense<0.000000e+00> : vector<50x16xf32>
    %7 = tpu.matmul %5, %4, %cst {dimension_numbers = #tpu.dot_dimension_numbers<[1], [1], [0], [0], [0, 0, 1, 0], [], []>} : vector<50x32xbf16>, vector<16x32xbf16>, vector<50x16xf32> -> vector<50x16xf32>
    %8 = arith.addf %6, %7 : vector<50x16xf32>
    %c0_6 = arith.constant 0 : index
    %c0_7 = arith.constant 0 : index
    %9 = vector.load %arg6[%c0_6, %c0_7] : memref<50x16xf32, #tpu.memory_space<vmem>>, vector<50x16xf32>
    tpu.vector_store %arg6[%c0_6, %c0_7], %8 {strides = array<i32>} : memref<50x16xf32, #tpu.memory_space<vmem>>, vector<50x16xf32>,
    %c0_i32_8 = arith.constant 0 : i32
    %10 = arith.cmpi eq, %arg1, %c0_i32_8 : i32
    %11 = arith.extui %10 : i1 to i32
    %c0_i32_9 = arith.constant 0 : i32
    %12 = arith.cmpi ne, %11, %c0_i32_9 : i32
    scf.if %12 {
      %c0_10 = arith.constant 0 : index
      %c0_11 = arith.constant 0 : index
      %13 = vector.load %arg6[%c0_10, %c0_11] : memref<50x16xf32, #tpu.memory_space<vmem>>, vector<50x16xf32>
      %c0_12 = arith.constant 0 : index
      %c0_13 = arith.constant 0 : index
      %14 = vector.load %arg4[%c0_12, %c0_13] : memref<50x1xf32, #tpu.memory_space<vmem>>, vector<50x1xf32>
      %15 = vector.broadcast %14 : vector<50x1xf32> to vector<50x16xf32>
      %16 = arith.addf %13, %15 : vector<50x16xf32>
      %cst_14 = arith.constant 0.000000e+00 : f32
      %17 = vector.broadcast %cst_14 : f32 to vector<50x16xf32>
      %18 = arith.maximumf %16, %17 : vector<50x16xf32>
      %cst_15 = arith.constant dense<0xFF800000> : vector<16xf32>
      %19 = vector.multi_reduction <maximumf>, %18, %cst_15 [0] : vector<50x16xf32> to vector<16xf32>
      %20 = vector.shape_cast %19 : vector<16xf32> to vector<1x16xf32>
      %21 = tpu.iota {dimensions = array<i32: 0>} : vector<50x16xi32>
      %22 = vector.broadcast %20 : vector<1x16xf32> to vector<50x16xf32>
      %23 = arith.cmpf oeq, %18, %22 : vector<50x16xf32>
      %c50_i32 = arith.constant 50 : i32
      %24 = vector.broadcast %c50_i32 : i32 to vector<50x16xi32>
      %25 = arith.select %23, %21, %24 : vector<50x16xi1>, vector<50x16xi32>
      %cst_16 = arith.constant dense<2147483647> : vector<16xi32>
      %26 = vector.multi_reduction <minsi>, %25, %cst_16 [0] : vector<50x16xi32> to vector<16xi32>
      %27 = vector.shape_cast %26 : vector<16xi32> to vector<1x16xi32>
      %28 = vector.shape_cast %27 : vector<1x16xi32> to vector<1x1x16xi32>
      %c0_17 = arith.constant 0 : index
      %c0_18 = arith.constant 0 : index
      %c0_19 = arith.constant 0 : index
      %29 = vector.load %arg5[%c0_17, %c0_18, %c0_19] : memref<1x1x16xi32, #tpu.memory_space<vmem>>, vector<1x1x16xi32>
      tpu.vector_store %arg5[%c0_17, %c0_18, %c0_19], %28 {strides = array<i32>} : memref<1x1x16xi32, #tpu.memory_space<vmem>>, vector<1x1x16xi32>,
    } else {
    }
    return
  }
  func.func @transform_0(%arg0: i32, %arg1: i32) -> (i32, i32) {
    %c0_i32 = arith.constant 0 : i32
    return %arg0, %arg1 : i32, i32
  }
  func.func @transform_1(%arg0: i32, %arg1: i32) -> (i32, i32) {
    %c0_i32 = arith.constant 0 : i32
    %c0_i32_0 = arith.constant 0 : i32
    return %c0_i32, %arg1 : i32, i32
  }
  func.func @transform_2(%arg0: i32, %arg1: i32) -> (i32, i32) {
    %c0_i32 = arith.constant 0 : i32
    %c0_i32_0 = arith.constant 0 : i32
    %c0_i32_1 = arith.constant 0 : i32
    return %c0_i32, %c0_i32_0 : i32, i32
  }
  func.func @transform_3(%arg0: i32, %arg1: i32) -> (i32, i32, i32) {
    %c0_i32 = arith.constant 0 : i32
    %c0_i32_0 = arith.constant 0 : i32
    %c0_i32_1 = arith.constant 0 : i32
    return %arg0, %c0_i32, %c0_i32_0 : i32, i32, i32
  }
}

</mosaic_0001>

<llo_original>
// kernel: tpu_custom_call.1
$region0: #{tpu_custom_call.1}
  #allocation0 [shape = 'u32[]', space=smem, size = 0x4, offset = 0x4, fixed_abs, tag = 'smem constant byte address 0x4 - core index']
  #allocation1 [shape = 'u32[72,128]{1,0:T(1,128)}', space=vmem, size = 0x9000, scoped, tag = 'internal scratch']
  #allocation2 [shape = 'f32[50,16]{1,0:T(8,128)}', space=vmem, size = 0x7000, scoped, tag = 'scratch operand']
  %s0 = inlined_call_operand.vmem [shape: f32[16,32], index: 0, kind: input, shape index: {}]
  %s1 = inlined_call_operand.vmem [shape: bf16[50,32], index: 1, kind: input, shape index: {}]
  %s2 = inlined_call_operand.vmem [shape: f32[50,1], index: 2, kind: input, shape index: {}]
  %s3 = inlined_call_operand.hbm [shape: s32[1,1,16], index: 3, kind: output, shape index: {}]
  %s4 = sld [smem:[#allocation0]]
  $region30: #{tpu_custom_call.1} parent=0
    _
  %s6 = ssub.s32 1, %s4
  %s7 = scalar_select 0, %s6, %s4
  $region1: #{tpu_custom_call.1} parent=0
    #allocation3 [shape = 'u8[512]{0}', space=vmem, size = 0x400, scoped, tag = 'output window, operand 0, single buffered']
    #allocation4 [shape = 's32[1]{0}', space=sflag, size = 0x4, scoped, tag = 'scoped memory for tpu_custom_call.1']
    %8 = vsyncpa [#allocation4], 0
    // Predicated region
    $region2: #{tpu_custom_call.1} parent=1 // pred_check
      _
    $region3: #{tpu_custom_call.1} parent=1 // pred_check_branch
      %10 = sbr.rel (0) target = $region5
    $region4: #{tpu_custom_call.1} parent=1 // pred_region
      _
    $region5: #{tpu_custom_call.1} parent=1 // pred_fallthru
      _
    // Predicated region
    $region6: #{tpu_custom_call.1} parent=1 // pred_check
      _
    $region7: #{tpu_custom_call.1} parent=1 // pred_check_branch
      %12 = sbr.rel (0) target = $region9
    $region8: #{tpu_custom_call.1} parent=1 // pred_region
      _
    $region9: #{tpu_custom_call.1} parent=1 // pred_fallthru
      _
    // Predicated region
    $region10: #{tpu_custom_call.1} parent=1 // pred_check
      _
    $region11: #{tpu_custom_call.1} parent=1 // pred_check_branch
      %14 = sbr.rel (0) target = $region13
    $region12: #{tpu_custom_call.1} parent=1 // pred_region
      _
    $region13: #{tpu_custom_call.1} parent=1 // pred_fallthru
      _
    %p16 = scmp.eq.s32.totalorder 0, 0
    // Predicated region
    $region14: #{tpu_custom_call.1} parent=1 // pred_check
      %p17 = pneg %p16
    $region15: #{tpu_custom_call.1} parent=1 // pred_check_branch
      %19 = sbr.rel (%p17) target = $region17
    $region16: #{tpu_custom_call.1} parent=1 // pred_region
      %vm20 = vcmask 130048
      %21 = vst.msk [vmem:[#allocation2] sm:$0xff] %vm20, 0.0
      %22 = vst.msk [vmem:[#allocation2 + $0x8] sm:$0xff] %vm20, 0.0
      %23 = vst.msk [vmem:[#allocation2 + $0x10] sm:$0xff] %vm20, 0.0
      %24 = vst.msk [vmem:[#allocation2 + $0x18] sm:$0xff] %vm20, 0.0
      %25 = vst.msk [vmem:[#allocation2 + $0x20] sm:$0xff] %vm20, 0.0
      %26 = vst.msk [vmem:[#allocation2 + $0x28] sm:$0xff] %vm20, 0.0
      %vm27 = vcmask 123904
      %28 = vst.msk [vmem:[#allocation2 + $0x30] sm:$0x3] %vm27, 0.0
    $region17: #{tpu_custom_call.1} parent=1 // pred_fallthru
      _
    %v29 = vld [vmem:[%s0] sm:$0xff]
    %v30 = vld [vmem:[%s0 + $0x8] sm:$0xff]
    %v31 = vpack.c.bf16 %v30, %v29
    %v32 = vld [vmem:[%s1] sm:$0xf]
    %v33 = vld [vmem:[%s1 + $0x4] sm:$0xf]
    %v34 = vld [vmem:[%s1 + $0x8] sm:$0xf]
    %v35 = vld [vmem:[%s1 + $0xc] sm:$0xf]
    %v36 = vld [vmem:[%s1 + $0x10] sm:$0xf]
    %v37 = vld [vmem:[%s1 + $0x14] sm:$0xf]
    %v38 = vld [vmem:[%s1 + $0x18] sm:$0x1]
    %v39 = vld [vmem:[#allocation2] sm:$0xff]
    %v40 = vld [vmem:[#allocation2 + $0x8] sm:$0xff]
    %v41 = vld [vmem:[#allocation2 + $0x10] sm:$0xff]
    %v42 = vld [vmem:[#allocation2 + $0x18] sm:$0xff]
    %v43 = vld [vmem:[#allocation2 + $0x20] sm:$0xff]
    %v44 = vld [vmem:[#allocation2 + $0x28] sm:$0xff]
    %v45 = vld [vmem:[#allocation2 + $0x30] sm:$0x3]
    %v53 = vunpack.c.l.b16 %v32
    %v54 = vunpack.c.l.b16 %v33
    %v55 = vunpack.c.l.b16 %v34
    %v56 = vunpack.c.l.b16 %v35
    %v57 = vunpack.c.l.b16 %v36
    %v58 = vunpack.c.l.b16 %v37
    %v59 = vunpack.c.l.b16 %v38
    %v60 = vpack.c.b16 %v54, %v53
    %v61 = vpack.c.b16 %v56, %v55
    %v62 = vpack.c.b16 %v58, %v57
    %v63 = vpack.c.b16 %v59, %v59
    %vm64 = vcmask 261120
    %v66 = vsel %vm64, %v60, 0
    %v69 = vsel %vm64, %v61, 0
    %v72 = vsel %vm64, %v62, 0
    %v75 = vsel %vm64, %v63, 0
    %v78 = vsel %vm64, %v31, 0
    %80 = vmatpush.bf16.xpose.msra.mxu0 0
    %81 = vmatpush.bf16.xpose.msra.mxu0 0
    %82 = vmatpush.bf16.xpose.msra.mxu0 0
    %83 = vmatpush.bf16.xpose.msra.mxu0 0
    %84 = vmatpush.bf16.xpose.msra.mxu0 0
    %85 = vmatpush.bf16.xpose.msra.mxu0 0
    %86 = vmatpush.bf16.xpose.msra.mxu0 0
    %87 = vmatpush.bf16.xpose.msra.mxu0 %v78
    %88 = vmatmul.bf16.gmra.mxu0 %v66
    %v89 = vpop.f32.mrf.mxu0
    %v90 = vadd.f32 0.0, %v89
    %v91 = vpop.f32.mrf.mxu0
    %v92 = vadd.f32 0.0, %v91
    %93 = vmatmul.bf16.gmra.mxu0 %v69
    %v94 = vpop.f32.mrf.mxu0
    %v95 = vadd.f32 0.0, %v94
    %v96 = vpop.f32.mrf.mxu0
    %v97 = vadd.f32 0.0, %v96
    %98 = vmatmul.bf16.gmra.mxu0 %v72
    %v99 = vpop.f32.mrf.mxu0
    %v100 = vadd.f32 0.0, %v99
    %v101 = vpop.f32.mrf.mxu0
    %v102 = vadd.f32 0.0, %v101
    %103 = vmatmul.bf16.gmra.mxu0 %v75
    %v104 = vpop.f32.mrf.mxu0
    %v105 = vadd.f32 0.0, %v104
    %v106 = vpop.f32.mrf.mxu0
    %107 = vdwg.mxu0
    %v108 = vadd.f32 %v39, %v90
    %v109 = vadd.f32 %v40, %v92
    %v110 = vadd.f32 %v41, %v95
    %v111 = vadd.f32 %v42, %v97
    %v112 = vadd.f32 %v43, %v100
    %v113 = vadd.f32 %v44, %v102
    %v114 = vadd.f32 %v45, %v105
    %vm115 = vcmask 130048
    %116 = vst.msk [vmem:[#allocation2] sm:$0xff] %vm115, %v108
    %117 = vst.msk [vmem:[#allocation2 + $0x8] sm:$0xff] %vm115, %v109
    %118 = vst.msk [vmem:[#allocation2 + $0x10] sm:$0xff] %vm115, %v110
    %119 = vst.msk [vmem:[#allocation2 + $0x18] sm:$0xff] %vm115, %v111
    %120 = vst.msk [vmem:[#allocation2 + $0x20] sm:$0xff] %vm115, %v112
    %121 = vst.msk [vmem:[#allocation2 + $0x28] sm:$0xff] %vm115, %v113
    %vm122 = vcmask 123904
    %123 = vst.msk [vmem:[#allocation2 + $0x30] sm:$0x3] %vm122, %v114
    // Predicated region
    $region18: #{tpu_custom_call.1} parent=1 // pred_check
      %p124 = pneg %p16
    $region19: #{tpu_custom_call.1} parent=1 // pred_check_branch
      %126 = sbr.rel (%p124) target = $region21
    $region20: #{tpu_custom_call.1} parent=1 // pred_region
      %v127 = vld [vmem:[#allocation2] sm:$0xff]
      %v128 = vld [vmem:[#allocation2 + $0x8] sm:$0xff]
      %v129 = vld [vmem:[#allocation2 + $0x10] sm:$0xff]
      %v130 = vld [vmem:[#allocation2 + $0x18] sm:$0xff]
      %v131 = vld [vmem:[#allocation2 + $0x20] sm:$0xff]
      %v132 = vld [vmem:[#allocation2 + $0x28] sm:$0xff]
      %v133 = vld [vmem:[#allocation2 + $0x30] sm:$0x3]
      %v134 = vld [vmem:[%s2] sm:$0xff]
      %v135 = vld [vmem:[%s2 + $0x8] sm:$0xff]
      %v136 = vld [vmem:[%s2 + $0x10] sm:$0xff]
      %v137 = vld [vmem:[%s2 + $0x18] sm:$0xff]
      %v138 = vld [vmem:[%s2 + $0x20] sm:$0xff]
      %v139 = vld [vmem:[%s2 + $0x28] sm:$0xff]
      %v140 = vld [vmem:[%s2 + $0x30] sm:$0x3]
      %142 = vset.pattern.permute.xlu0 0
      %143 = vperm.xlu0 %142, %v134
      %v144 = vpop.permute.xlu0 %143
      %147 = vset.pattern.permute.xlu0 0
      %148 = vperm.xlu0 %147, %v135
      %v149 = vpop.permute.xlu0 %148
      %152 = vset.pattern.permute.xlu0 0
      %153 = vperm.xlu0 %152, %v136
      %v154 = vpop.permute.xlu0 %153
      %157 = vset.pattern.permute.xlu0 0
      %158 = vperm.xlu0 %157, %v137
      %v159 = vpop.permute.xlu0 %158
      %162 = vset.pattern.permute.xlu0 0
      %163 = vperm.xlu0 %162, %v138
      %v164 = vpop.permute.xlu0 %163
      %167 = vset.pattern.permute.xlu0 0
      %168 = vperm.xlu0 %167, %v139
      %v169 = vpop.permute.xlu0 %168
      %172 = vset.pattern.permute.xlu0 0
      %173 = vperm.xlu0 %172, %v140
      %v174 = vpop.permute.xlu0 %173
      %v176 = vadd.f32 %v127, %v144
      %v177 = vadd.f32 %v128, %v149
      %v178 = vadd.f32 %v129, %v154
      %v179 = vadd.f32 %v130, %v159
      %v180 = vadd.f32 %v131, %v164
      %v181 = vadd.f32 %v132, %v169
      %v182 = vadd.f32 %v133, %v174
      %v183 = vmax.f32 %v176, 0.0
      %v184 = vmax.f32 %v177, 0.0
      %v185 = vmax.f32 %v178, 0.0
      %v186 = vmax.f32 %v179, 0.0
      %v187 = vmax.f32 %v180, 0.0
      %v188 = vmax.f32 %v181, 0.0
      %v189 = vmax.f32 %v182, 0.0
      %v190 = vsel %vm115, %v183, -inf
      %v191 = vsel %vm115, %v184, -inf
      %v192 = vsel %vm115, %v185, -inf
      %v193 = vsel %vm115, %v186, -inf
      %v194 = vsel %vm115, %v187, -inf
      %v195 = vmax.f32 %v190, %v194
      %v196 = vsel %vm115, %v188, -inf
      %v197 = vmax.f32 %v191, %v196
      %v198 = vsel %vm122, %v189, -inf
      %v199 = vmax.f32 %v192, %v198
      %v200 = vmax.f32 %v195, %v197
      %v201 = vmax.f32 %v199, %v193
      %v202 = vmax.f32 %v200, %v201
      %v203 = vrot.slane %v202, 4
      %v204 = vmax.f32 %v202, %v203
      %v205 = vrot.slane %v204, 2
      %v206 = vmax.f32 %v204, %v205
      %v207 = vrot.slane %v206, 1
      %v208 = vmax.f32 %v206, %v207
      %v209 = vlaneseq
      %v210 = vshrl.u32 %v209, 7
      %v211 = vadd.s32 %v210, 8
      %v212 = vadd.s32 %v210, 16
      %v213 = vadd.s32 %v210, 24
      %v214 = vadd.s32 %v210, 32
      %v215 = vadd.s32 %v210, 40
      %v216 = vadd.s32 %v210, 48
      %vm217 = vcmp.eq.f32.partialorder %v183, %v208
      %vm218 = vcmp.eq.f32.partialorder %v184, %v208
      %vm219 = vcmp.eq.f32.partialorder %v185, %v208
      %vm220 = vcmp.eq.f32.partialorder %v186, %v208
      %vm221 = vcmp.eq.f32.partialorder %v187, %v208
      %vm222 = vcmp.eq.f32.partialorder %v188, %v208
      %vm223 = vcmp.eq.f32.partialorder %v189, %v208
      %v224 = vsel %vm217, %v210, 50
      %v225 = vsel %vm218, %v211, 50
      %v226 = vsel %vm219, %v212, 50
      %v227 = vsel %vm220, %v213, 50
      %v228 = vsel %vm221, %v214, 50
      %v229 = vsel %vm222, %v215, 50
      %v230 = vsel %vm223, %v216, 50
      %v231 = vsel %vm115, %v224, 2147483647
      %v232 = vsel %vm115, %v225, 2147483647
      %v233 = vsel %vm115, %v226, 2147483647
      %v234 = vsel %vm115, %v227, 2147483647
      %v235 = vsel %vm115, %v228, 2147483647
      %vm236 = vcmp.lt.s32.totalorder %v231, %v235
      %v237 = vsel %vm236, %v231, %v235
      %v238 = vsel %vm115, %v229, 2147483647
      %vm239 = vcmp.lt.s32.totalorder %v232, %v238
      %v240 = vsel %vm239, %v232, %v238
      %v241 = vsel %vm122, %v230, 2147483647
      %vm242 = vcmp.lt.s32.totalorder %v233, %v241
      %v243 = vsel %vm242, %v233, %v241
      %vm244 = vcmp.lt.s32.totalorder %v237, %v240
      %v245 = vsel %vm244, %v237, %v240
      %vm246 = vcmp.lt.s32.totalorder %v243, %v234
      %v247 = vsel %vm246, %v243, %v234
      %vm248 = vcmp.lt.s32.totalorder %v245, %v247
      %v249 = vsel %vm248, %v245, %v247
      %v250 = vrot.slane %v249, 4
      %vm251 = vcmp.lt.s32.totalorder %v249, %v250
      %v252 = vsel %vm251, %v249, %v250
      %v253 = vrot.slane %v252, 2
      %vm254 = vcmp.lt.s32.totalorder %v252, %v253
      %v255 = vsel %vm254, %v252, %v253
      %v256 = vrot.slane %v255, 1
      %vm257 = vcmp.lt.s32.totalorder %v255, %v256
      %v258 = vsel %vm257, %v255, %v256
      %vm259 = vcmask 122880
      %260 = vst.msk [vmem:[#allocation3] sm:$0x1] %vm259, %v258
    $region21: #{tpu_custom_call.1} parent=1 // pred_fallthru
      _
    // Predicated region
    $region22: #{tpu_custom_call.1} parent=1 // pred_check
      _
    $region23: #{tpu_custom_call.1} parent=1 // pred_check_branch
      %262 = sbr.rel (0) target = $region25
    $region24: #{tpu_custom_call.1} parent=1 // pred_region
      %264 = vsyncadd [#allocation4], 0
      %s266 = sshll.u32 [#allocation3], 4
      %s267 = int_to_ptr.vmem [resolvable:$true] %s266
      %s268 = sshll.u32 %s3, 4
      %s269 = int_to_ptr.hbm [resolvable:$true] %s268
      %271 = dma.vmem_to_hbm [thread:$0]  %s267, 16, %s269, [#allocation4]
    $region25: #{tpu_custom_call.1} parent=1 // pred_fallthru
      _
    // Predicated region
    $region26: #{tpu_custom_call.1} parent=1 // pred_check
      _
    $region27: #{tpu_custom_call.1} parent=1 // pred_check_branch
      %273 = sbr.rel (0) target = $region29
    $region28: #{tpu_custom_call.1} parent=1 // pred_region
      %275 = dma.done [#allocation4], 16
    $region29: #{tpu_custom_call.1} parent=1 // pred_fallthru
      _
    %276 = vsyncpa [#allocation4], 1

</llo_original>
